<compile_context>
chip_gen: v6e
topology: v6e:2x2x1
jax: 0.10.0
libtpu: 0.0.40
codegen_flags: <defaults>
</compile_context>

<pallas_src>
import functools

import jax
import jax.numpy as jnp
from jax.experimental import pallas as pl
from jax.experimental.pallas import tpu as pltpu

MID_CHANNELS = 16
N_HEADS = 4
N_POINTS = 4
N_CORNERS = 4
BN_EPS = 1e-3

_COMPILER_PARAMS = pltpu.CompilerParams(
    dimension_semantics=("parallel",),
    vmem_limit_bytes=32 * 1024 * 1024,
)


def _round_up(x, m):
    return ((x + m - 1) // m) * m


def _bcast_spec(shape):
    nd = len(shape)
    return pl.BlockSpec(shape, lambda i, _nd=nd: (0,) * _nd)


# ----------------------------------------------------------------------------
# Kernel 1: image value projection  value = img_flat @ Wv + bv     (rows tiled)
# ----------------------------------------------------------------------------
def _value_kernel(img_ref, wv_ref, bv_ref, o_ref):
    o_ref[...] = (jnp.dot(img_ref[...], wv_ref[...],
                          preferred_element_type=jnp.float32)
                  + bv_ref[...]).astype(o_ref.dtype)


def value_proj(img2d, wv, bv, *, tile=512):
    m, c = img2d.shape
    tile = min(tile, _round_up(m, 8))
    nt = -(-m // tile)
    mp = nt * tile
    if mp != m:
        img2d = jnp.pad(img2d, ((0, mp - m), (0, 0)))
    out = pl.pallas_call(
        _value_kernel,
        grid=(nt,),
        in_specs=[pl.BlockSpec((tile, c), lambda i: (i, 0)),
                  _bcast_spec((c, c)),
                  _bcast_spec((1, c))],
        out_specs=pl.BlockSpec((tile, c), lambda i: (i, 0)),
        out_shape=jax.ShapeDtypeStruct((mp, c), jnp.float32),
        compiler_params=_COMPILER_PARAMS,
    )(img2d, wv, bv.reshape(1, c))
    return out[:m]


# ----------------------------------------------------------------------------
# Kernel 2: fused pts_key_proj (Linear + BN) + deform query projections
#   outputs: q (TN,C), corner indices (TN, 4*H*P) int32,
#            combined weights (bilinear * attention, zero-padded OOB) (TN, 4*H*P)
# Column ordering j = corner * (H*P) + (head*P + point).
# ----------------------------------------------------------------------------
def _prep_kernel(pf_ref, refx_ref, refy_ref,
                 wk_ref, bk_ref, ksc_ref, ksh_ref,
                 wcat_ref, bcat_ref,
                 q_ref, idx_ref, wgt_ref,
                 *, n_heads, n_points, f_h, f_w):
    hp = n_heads * n_points

    x = pf_ref[...]
    q = jnp.dot(x, wk_ref[...], preferred_element_type=jnp.float32) + bk_ref[...]
    q = q * ksc_ref[...] + ksh_ref[...]
    q_ref[...] = q.astype(q_ref.dtype)

    # fused offset-x / offset-y / attention projections: one (C, 3*HP) matmul
    proj = jnp.dot(q, wcat_ref[...], preferred_element_type=jnp.float32) + bcat_ref[...]
    off_x = proj[:, 0:hp]
    off_y = proj[:, hp:2 * hp]
    logits = proj[:, 2 * hp:3 * hp]

    # per-head softmax over the sampling points
    attn_parts = []
    for h in range(n_heads):
        lg = logits[:, h * n_points:(h + 1) * n_points]
        lg = lg - jnp.max(lg, axis=-1, keepdims=True)
        e = jnp.exp(lg)
        inv = pl.reciprocal(jnp.sum(e, axis=-1, keepdims=True), approx=True)
        attn_parts.append(e * inv)
    attn = jnp.concatenate(attn_parts, axis=-1)                      # (TN, HP)

    # sampling pixel coordinates (grid_sample, align_corners=False)
    px = refx_ref[...] * float(f_w) + off_x - 0.5                    # (TN, HP)
    py = refy_ref[...] * float(f_h) + off_y - 0.5
    x0 = jnp.floor(px)
    y0 = jnp.floor(py)
    tx = px - x0
    ty = py - y0
    x0i = x0.astype(jnp.int32)
    y0i = y0.astype(jnp.int32)
    x1i = x0i + 1
    y1i = y0i + 1

    corners = ((y0i, x0i, (1.0 - ty) * (1.0 - tx)),
               (y0i, x1i, (1.0 - ty) * tx),
               (y1i, x0i, ty * (1.0 - tx)),
               (y1i, x1i, ty * tx))
    idx_parts = []
    wgt_parts = []
    for (yi, xi, wbl) in corners:
        valid = (xi >= 0) & (xi < f_w) & (yi >= 0) & (yi < f_h)      # zero padding
        idx_parts.append(jnp.clip(yi, 0, f_h - 1) * f_w + jnp.clip(xi, 0, f_w - 1))
        wgt_parts.append(jnp.where(valid, wbl, 0.0) * attn)

    idx_ref[...] = jnp.concatenate(idx_parts, axis=-1).astype(jnp.int32)
    wgt_ref[...] = jnp.concatenate(wgt_parts, axis=-1).astype(wgt_ref.dtype)


def deform_prep(pf, refx, refy, wk, bk, ksc, ksh, wcat, bcat, *,
                tn, n_heads, n_points, f_h, f_w):
    npad, c = pf.shape
    hp = n_heads * n_points
    ncols = N_CORNERS * hp
    nt = npad // tn
    kern = functools.partial(_prep_kernel, n_heads=n_heads, n_points=n_points,
                             f_h=f_h, f_w=f_w)
    in_specs = [
        pl.BlockSpec((tn, c), lambda i: (i, 0)),
        pl.BlockSpec((tn, 1), lambda i: (i, 0)),
        pl.BlockSpec((tn, 1), lambda i: (i, 0)),
        _bcast_spec((c, c)), _bcast_spec((1, c)), _bcast_spec((1, c)), _bcast_spec((1, c)),
        _bcast_spec((c, 3 * hp)), _bcast_spec((1, 3 * hp)),
    ]
    out_specs = (pl.BlockSpec((tn, c), lambda i: (i, 0)),
                 pl.BlockSpec((tn, ncols), lambda i: (i, 0)),
                 pl.BlockSpec((tn, ncols), lambda i: (i, 0)))
    out_shape = (jax.ShapeDtypeStruct((npad, c), jnp.float32),
                 jax.ShapeDtypeStruct((npad, ncols), jnp.int32),
                 jax.ShapeDtypeStruct((npad, ncols), jnp.float32))
    return pl.pallas_call(
        kern, grid=(nt,), in_specs=in_specs, out_specs=out_specs, out_shape=out_shape,
        compiler_params=_COMPILER_PARAMS,
    )(pf, refx, refy, wk, bk.reshape(1, c), ksc.reshape(1, c), ksh.reshape(1, c),
      wcat, bcat.reshape(1, 3 * hp))


# ----------------------------------------------------------------------------
# Kernel 3: head reduction (weighted @ R) + deform output projection + masked
#           select against pts_feats_org + fusion_withdeform
# ----------------------------------------------------------------------------
def _fuse_kernel(wgtd_ref, q_ref, mask_ref, pf_ref,
                 red_ref, wo_ref, bo_ref,
                 wt_ref, bt_ref, tsc_ref, tsh_ref,
                 wf1_ref, wf2_ref, bf_ref, fsc_ref, fsh_ref,
                 o_ref):
    # sum the 16 weighted samples of each head back to its hd channels (fixed 0/1 matrix)
    pre = jnp.dot(wgtd_ref[...], red_ref[...], preferred_element_type=jnp.float32)
    deform = jnp.dot(pre, wo_ref[...], preferred_element_type=jnp.float32) + bo_ref[...]
    # points outside the image keep pts_feats_org
    img = jnp.where(mask_ref[...] > 0.5, deform, q_ref[...])

    # fusion_withdeform: pts_transform (Linear+BN), ReLU on concat, fuse_conv (Linear+BN+ReLU)
    pts = jnp.dot(pf_ref[...], wt_ref[...], preferred_element_type=jnp.float32) + bt_ref[...]
    pts = pts * tsc_ref[...] + tsh_ref[...]
    pts = jnp.maximum(pts, 0.0)                     # activate_out on the concat == per-half ReLU
    img = jnp.maximum(img, 0.0)
    y = jnp.dot(pts, wf1_ref[...], preferred_element_type=jnp.float32)
    y = y + jnp.dot(img, wf2_ref[...], preferred_element_type=jnp.float32)
    y = y + bf_ref[...]
    y = y * fsc_ref[...] + fsh_ref[...]
    o_ref[...] = jnp.maximum(y, 0.0).astype(o_ref.dtype)


def fuse_withdeform(weighted, q, mask, pf, reduce_mat, params, *, tn):
    npad, wcols = weighted.shape
    c = q.shape[1]
    nt = npad // tn
    in_specs = [
        pl.BlockSpec((tn, wcols), lambda i: (i, 0)),
        pl.BlockSpec((tn, c), lambda i: (i, 0)),
        pl.BlockSpec((tn, 1), lambda i: (i, 0)),
        pl.BlockSpec((tn, c), lambda i: (i, 0)),
        _bcast_spec((wcols, c)),
        _bcast_spec((c, c)), _bcast_spec((1, c)),
        _bcast_spec((c, c)), _bcast_spec((1, c)), _bcast_spec((1, c)), _bcast_spec((1, c)),
        _bcast_spec((c, c)), _bcast_spec((c, c)), _bcast_spec((1, c)),
        _bcast_spec((1, c)), _bcast_spec((1, c)),
    ]
    return pl.pallas_call(
        _fuse_kernel, grid=(nt,), in_specs=in_specs,
        out_specs=pl.BlockSpec((tn, c), lambda i: (i, 0)),
        out_shape=jax.ShapeDtypeStruct((npad, c), jnp.float32),
        compiler_params=_COMPILER_PARAMS,
    )(weighted, q, mask, pf, reduce_mat,
      params['deform']['w_out'], params['deform']['b_out'].reshape(1, c),
      params['trans_w'], params['trans_b'].reshape(1, c),
      params['trans_bn_scale'].reshape(1, c), params['trans_bn_shift'].reshape(1, c),
      params['fc_w1'], params['fc_w2'], params['fc_b'].reshape(1, c),
      params['fc_bn_scale'].reshape(1, c), params['fc_bn_shift'].reshape(1, c))


# ----------------------------------------------------------------------------
# Full forward (glue in plain JAX, hot paths in the Pallas kernels above)
# ----------------------------------------------------------------------------
def voxel_with_point_projection_forward(params, batch_dict, point_features, point_coords,
                                        layer_name='layer1', tile_n=256):
    B = batch_dict['batch_size']
    images = batch_dict['images']                                    # (B, 3, H, W) NCHW
    h, w = images.shape[2], images.shape[3]
    image_feat = batch_dict['image_features'][layer_name + '_feat2d']    # (B, C, fH, fW)
    _, c_img, f_h, f_w = image_feat.shape
    hw = f_h * f_w
    image_shape = batch_dict['image_shape']                          # (B, 2) raw [H, W]
    proj = batch_dict['calib']                                       # (B, 3, 4) lidar->image

    n, c = point_features.shape
    hd = c // N_HEADS
    hp = N_HEADS * N_POINTS
    ncols = N_CORNERS * hp

    batch_idx = point_coords[:, 0].astype(jnp.int32)
    xyz = point_coords[:, 1:4]
    pts_hom = jnp.concatenate([xyz, jnp.ones((n, 1), xyz.dtype)], axis=-1)

    # per-point lidar->image projection using that point's calib (no per-batch loop)
    p_pt = proj[batch_idx]                                           # (N, 3, 4)
    cam = jnp.einsum('nij,nj->ni', p_pt, pts_hom)
    depth = cam[:, 2]
    depth = jnp.where(jnp.abs(depth) < 1e-6, 1e-6, depth)
    ui = (cam[:, 0] / depth).astype(jnp.int32)                       # trunc == torch .long()
    vi = (cam[:, 1] / depth).astype(jnp.int32)
    in_img = (ui >= 0) & (ui < w) & (vi >= 0) & (vi < h)

    # image_interp=False: rescale pixel grid to feature-map resolution, requantize
    raw_h = image_shape[batch_idx, 0].astype(jnp.float32)
    raw_w = image_shape[batch_idx, 1].astype(jnp.float32)
    uf = (ui.astype(jnp.float32) * (float(f_w) / raw_w)).astype(jnp.int32)
    vf = (vi.astype(jnp.float32) * (float(f_h) / raw_h)).astype(jnp.int32)
    refx = jnp.clip(uf.astype(jnp.float32) / float(f_w), 0.0, 1.0)
    refy = jnp.clip(vf.astype(jnp.float32) / float(f_h), 0.0, 1.0)

    # stable grouping by batch index == torch.cat of per-batch boolean-mask slices
    order = jnp.argsort(batch_idx, stable=True)
    pf_sorted = point_features[order]
    refx_s = refx[order][:, None]
    refy_s = refy[order][:, None]
    mask_s = in_img[order].astype(jnp.float32)[:, None]
    bidx_s = batch_idx[order]

    # pad the point axis to a tile multiple (padded rows are finite and sliced off)
    tn = min(tile_n, _round_up(n, 8))
    npad = _round_up(n, tn)
    pad = npad - n
    if pad:
        pf_sorted = jnp.pad(pf_sorted, ((0, pad), (0, 0)))
        refx_s = jnp.pad(refx_s, ((0, pad), (0, 0)))
        refy_s = jnp.pad(refy_s, ((0, pad), (0, 0)))
        mask_s = jnp.pad(mask_s, ((0, pad), (0, 0)))
        bidx_s = jnp.pad(bidx_s, ((0, pad),))
        pf_orig = jnp.pad(point_features, ((0, pad), (0, 0)))
    else:
        pf_orig = point_features

    dp = params['deform']
    wcat = jnp.concatenate([dp['w_off_x'], dp['w_off_y'], dp['w_attn']], axis=1)   # (C, 48)
    bcat = jnp.concatenate([dp['b_off_x'], dp['b_off_y'], dp['b_attn']], axis=0)

    # ---- Pallas kernel 1: value projection of all flattened image features ----
    img2d = jnp.transpose(image_feat, (0, 2, 3, 1)).reshape(B * hw, c_img)
    value2d = value_proj(img2d, dp['w_val'], dp['b_val'])
    value4 = value2d.reshape(B, hw, N_HEADS, hd)

    # ---- Pallas kernel 2: fused pts_key_proj + offset/attention projections ----
    q_s, idx_s, wgt_s = deform_prep(pf_sorted, refx_s, refy_s,
                                    params['key_w'], params['key_b'],
                                    params['key_bn_scale'], params['key_bn_shift'],
                                    wcat, bcat, tn=tn,
                                    n_heads=N_HEADS, n_points=N_POINTS, f_h=f_h, f_w=f_w)

    # ---- XLA glue: 4-corner bilinear gather of only the per-head value channels ----
    # TODO(synk): Pallas TPU has no general dynamic row-gather primitive; done with XLA gather.
    head_of_col = (jnp.arange(ncols) % hp) // N_POINTS               # (64,)
    sampled = value4[bidx_s[:, None], idx_s, head_of_col[None, :], :]    # (Np, 64, hd)
    weighted = (sampled * wgt_s[:, :, None]).reshape(npad, ncols * hd)   # (Np, 256)

    # fixed 0/1 reduction matrix mapping the 64 weighted samples back to head channels
    jj = jnp.arange(ncols)
    dd = jnp.arange(hd)
    rows = (jj[:, None] * hd + dd[None, :]).reshape(-1)
    cols = (((jj[:, None] % hp) // N_POINTS) * hd + dd[None, :]).reshape(-1)
    reduce_mat = jnp.zeros((ncols * hd, c), jnp.float32).at[rows, cols].set(1.0)

    # ---- Pallas kernel 3: head reduce + output proj + masked select + fusion ----
    out = fuse_withdeform(weighted, q_s, mask_s, pf_orig, reduce_mat, params, tn=tn)
    return out[:n]


# ----------------------------------------------------------------------------
# Deterministic parameter init (shapes dictated by __init__ with mid_channels=16)
# ----------------------------------------------------------------------------
def init_params(key, c=MID_CHANNELS, n_heads=N_HEADS, n_points=N_POINTS):
    hp = n_heads * n_points
    ks = jax.random.split(key, 20)

    def nrm(k, shape, s=0.1):
        return s * jax.random.normal(k, shape, dtype=jnp.float32)

    def bn_affine():
        gamma = jnp.ones((c,), jnp.float32)
        beta = jnp.zeros((c,), jnp.float32)
        mean = jnp.zeros((c,), jnp.float32)
        var = jnp.ones((c,), jnp.float32)
        scale = gamma / jnp.sqrt(var + BN_EPS)
        shift = beta - mean * scale
        return scale, shift

    key_scale, key_shift = bn_affine()
    trans_scale, trans_shift = bn_affine()
    fc_scale, fc_shift = bn_affine()

    params = {
        # pts_key_proj: Linear(c, c) + BN
        'key_w': nrm(ks[0], (c, c)), 'key_b': nrm(ks[1], (c,)),
        'key_bn_scale': key_scale, 'key_bn_shift': key_shift,
        # pts_transform: Linear(c, c) + BN
        'trans_w': nrm(ks[2], (c, c)), 'trans_b': nrm(ks[3], (c,)),
        'trans_bn_scale': trans_scale, 'trans_bn_shift': trans_shift,
        # fuse_conv: Linear(2c, c) + BN + ReLU  (weight split into two (c, c) halves)
        'fc_w1': nrm(ks[4], (c, c)), 'fc_w2': nrm(ks[5], (c, c)), 'fc_b': nrm(ks[6], (c,)),
        'fc_bn_scale': fc_scale, 'fc_bn_shift': fc_shift,
        # DeformTransLayer (MSDeformAttn, n_levels=1, n_heads=4, n_points=4)
        'deform': {
            'w_off_x': nrm(ks[7], (c, hp)), 'b_off_x': nrm(ks[8], (hp,)),
            'w_off_y': nrm(ks[9], (c, hp)), 'b_off_y': nrm(ks[10], (hp,)),
            'w_attn': nrm(ks[11], (c, hp)), 'b_attn': nrm(ks[12], (hp,)),
            'w_val': nrm(ks[13], (c, c)), 'b_val': nrm(ks[14], (c,)),
            'w_out': nrm(ks[15], (c, c)), 'b_out': nrm(ks[16], (c,)),
        },
    }
    return params


if __name__ == "__main__":
    key = jax.random.PRNGKey(0)
    B = 2
    N = 500
    C = MID_CHANNELS
    H = W = 32          # raw image size
    fH = fW = 16        # feature map size

    k = jax.random.split(key, 8)
    params = init_params(k[0])

    point_features = jax.random.normal(k[1], (N, C), dtype=jnp.float32)

    # point_coords: (N, 4) = [batch_idx, x, y, z] (lidar frame), batches interleaved
    batch_idx = (jnp.arange(N) % B).astype(jnp.float32)
    px = jax.random.uniform(k[2], (N,), minval=4.0, maxval=10.0)
    py = jax.random.uniform(k[3], (N,), minval=-6.0, maxval=6.0)
    pz = jax.random.uniform(k[4], (N,), minval=-6.0, maxval=6.0)
    point_coords = jnp.stack([batch_idx, px, py, pz], axis=-1)

    images = jax.random.normal(k[5], (B, 3, H, W), dtype=jnp.float32)          # NCHW
    image_feat = jax.random.normal(k[6], (B, C, fH, fW), dtype=jnp.float32)    # NCHW
    image_shape = jnp.array([[H, W], [H, W]], dtype=jnp.int32)

    # simple pinhole "calib": cam x = -y_lidar, cam y = -z_lidar, cam z = x_lidar
    fx = fy = 16.0
    cx = cy = 16.0
    Kmat = jnp.array([[fx, 0.0, cx], [0.0, fy, cy], [0.0, 0.0, 1.0]], jnp.float32)
    Tmat = jnp.array([[0.0, -1.0, 0.0, 0.0],
                      [0.0, 0.0, -1.0, 0.0],
                      [1.0, 0.0, 0.0, 0.0]], jnp.float32)
    Pmat = Kmat @ Tmat                                                          # (3, 4)
    proj = jnp.stack([Pmat, Pmat], axis=0)

    batch_dict = {
        'batch_size': B,
        'images': images,
        'image_features': {'layer1_feat2d': image_feat},
        'image_shape': image_shape,
        'calib': proj,
    }

    out = voxel_with_point_projection_forward(params, batch_dict, point_features,
                                              point_coords, layer_name='layer1',
                                              tile_n=256)
    out = jax.block_until_ready(out)
    assert out.shape == (N, C), out.shape
    assert bool(jnp.all(jnp.isfinite(out)))
    print("KERNEL_OK")
</pallas_src>

<mosaic_0001>
module attributes {stable_mosaic.version = 11 : i64} {
  func.func @_value_kernel(%arg0: i32, %arg1: memref<512x16xf32, #tpu.memory_space<vmem>>, %arg2: memref<16x16xf32, #tpu.memory_space<vmem>>, %arg3: memref<1x16xf32, #tpu.memory_space<vmem>>, %arg4: memref<512x16xf32, #tpu.memory_space<vmem>>) attributes {dimension_semantics = [#tpu.dimension_semantics<parallel>], iteration_bounds = array<i64: 1>, scalar_prefetch = 0 : i64, scratch_operands = 0 : i64, tpu.core_type = #tpu.core_type<tc>, window_params = [{transform_indices = @transform_0, window_bounds = array<i64: 512, 16>}, {pipeline_mode = #tpu.pipeline_mode<synchronous>, transform_indices = @transform_1, window_bounds = array<i64: 16, 16>}, {pipeline_mode = #tpu.pipeline_mode<synchronous>, transform_indices = @transform_2, window_bounds = array<i64: 1, 16>}, {transform_indices = @transform_3, window_bounds = array<i64: 512, 16>}]} {
    %c0 = arith.constant 0 : index
    %c0_0 = arith.constant 0 : index
    %0 = vector.load %arg1[%c0, %c0_0] : memref<512x16xf32, #tpu.memory_space<vmem>>, vector<512x16xf32>
    %c0_1 = arith.constant 0 : index
    %c0_2 = arith.constant 0 : index
    %1 = vector.load %arg2[%c0_1, %c0_2] : memref<16x16xf32, #tpu.memory_space<vmem>>, vector<16x16xf32>
    %cst = arith.constant dense<0.000000e+00> : vector<512x16xf32>
    %2 = tpu.matmul %0, %1, %cst {dimension_numbers = #tpu.dot_dimension_numbers<[1], [0], [0], [1], [0, 0, 1, 1], [], []>} : vector<512x16xf32>, vector<16x16xf32>, vector<512x16xf32> -> vector<512x16xf32>
    %c0_3 = arith.constant 0 : index
    %c0_4 = arith.constant 0 : index
    %3 = vector.load %arg3[%c0_3, %c0_4] : memref<1x16xf32, #tpu.memory_space<vmem>>, vector<1x16xf32>
    %4 = vector.broadcast %3 : vector<1x16xf32> to vector<512x16xf32>
    %5 = arith.addf %2, %4 : vector<512x16xf32>
    %c0_5 = arith.constant 0 : index
    %c0_6 = arith.constant 0 : index
    %6 = vector.load %arg4[%c0_5, %c0_6] : memref<512x16xf32, #tpu.memory_space<vmem>>, vector<512x16xf32>
    tpu.vector_store %arg4[%c0_5, %c0_6], %5 {strides = array<i32>} : memref<512x16xf32, #tpu.memory_space<vmem>>, vector<512x16xf32>,
    return
  }
  func.func @transform_0(%arg0: i32) -> (i32, i32) {
    %c0_i32 = arith.constant 0 : i32
    %c0_i32_0 = arith.constant 0 : i32
    return %arg0, %c0_i32 : i32, i32
  }
  func.func @transform_1(%arg0: i32) -> (i32, i32) {
    %c0_i32 = arith.constant 0 : i32
    %c0_i32_0 = arith.constant 0 : i32
    %c0_i32_1 = arith.constant 0 : i32
    return %c0_i32, %c0_i32_0 : i32, i32
  }
  func.func @transform_2(%arg0: i32) -> (i32, i32) {
    %c0_i32 = arith.constant 0 : i32
    %c0_i32_0 = arith.constant 0 : i32
    %c0_i32_1 = arith.constant 0 : i32
    return %c0_i32, %c0_i32_0 : i32, i32
  }
  func.func @transform_3(%arg0: i32) -> (i32, i32) {
    %c0_i32 = arith.constant 0 : i32
    %c0_i32_0 = arith.constant 0 : i32
    return %arg0, %c0_i32 : i32, i32
  }
}

</mosaic_0001>

<llo_original>
// kernel: tpu_custom_call.1
$region0: #{tpu_custom_call.1}
  #allocation0 [shape = 'u32[]', space=smem, size = 0x4, offset = 0x4, fixed_abs, tag = 'smem constant byte address 0x4 - core index']
  #allocation1 [shape = 'u32[144,128]{1,0:T(1,128)}', space=vmem, size = 0x12000, scoped, tag = 'internal scratch']
  %s0 = inlined_call_operand.vmem [shape: f32[512,16], index: 0, kind: input, shape index: {}]
  %s1 = inlined_call_operand.vmem [shape: f32[16,16], index: 1, kind: input, shape index: {}]
  %s2 = inlined_call_operand.vmem [shape: f32[1,16], index: 2, kind: input, shape index: {}]
  %s3 = inlined_call_operand.vmem [shape: f32[512,16], index: 3, kind: output, shape index: {}]
  %s4 = sld [smem:[#allocation0]]
  $region22: #{tpu_custom_call.1} parent=0
    _
  %s6 = ssub.s32 1, %s4
  %s7 = scalar_select 0, %s6, %s4
  // Predicated region
  $region2: #{tpu_custom_call.1} parent=0 // pred_check
    _
  $region3: #{tpu_custom_call.1} parent=0 // pred_check_branch
    %9 = sbr.rel (0) target = $region5
  $region4: #{tpu_custom_call.1} parent=0 // pred_region
    _
  $region5: #{tpu_custom_call.1} parent=0 // pred_fallthru
    _
  // Predicated region
  $region6: #{tpu_custom_call.1} parent=0 // pred_check
    _
  $region7: #{tpu_custom_call.1} parent=0 // pred_check_branch
    %11 = sbr.rel (0) target = $region9
  $region8: #{tpu_custom_call.1} parent=0 // pred_region
    _
  $region9: #{tpu_custom_call.1} parent=0 // pred_fallthru
    _
  // Predicated region
  $region10: #{tpu_custom_call.1} parent=0 // pred_check
    _
  $region11: #{tpu_custom_call.1} parent=0 // pred_check_branch
    %13 = sbr.rel (0) target = $region13
  $region12: #{tpu_custom_call.1} parent=0 // pred_region
    _
  $region13: #{tpu_custom_call.1} parent=0 // pred_fallthru
    _
  %v14 = vld [vmem:[%s0] sm:$0xff]
  %v15 = vld [vmem:[%s0 + $0x8] sm:$0xff]
  %v16 = vld [vmem:[%s0 + $0x10] sm:$0xff]
  %v17 = vld [vmem:[%s0 + $0x18] sm:$0xff]
  %v18 = vld [vmem:[%s0 + $0x20] sm:$0xff]
  %v19 = vld [vmem:[%s0 + $0x28] sm:$0xff]
  %v20 = vld [vmem:[%s0 + $0x30] sm:$0xff]
  %v21 = vld [vmem:[%s0 + $0x38] sm:$0xff]
  %v22 = vld [vmem:[%s0 + $0x40] sm:$0xff]
  %v23 = vld [vmem:[%s0 + $0x48] sm:$0xff]
  %v24 = vld [vmem:[%s0 + $0x50] sm:$0xff]
  %v25 = vld [vmem:[%s0 + $0x58] sm:$0xff]
  %v26 = vld [vmem:[%s0 + $0x60] sm:$0xff]
  %v27 = vld [vmem:[%s0 + $0x68] sm:$0xff]
  %v28 = vld [vmem:[%s0 + $0x70] sm:$0xff]
  %v29 = vld [vmem:[%s0 + $0x78] sm:$0xff]
  %v30 = vld [vmem:[%s0 + $0x80] sm:$0xff]
  %v31 = vld [vmem:[%s0 + $0x88] sm:$0xff]
  %v32 = vld [vmem:[%s0 + $0x90] sm:$0xff]
  %v33 = vld [vmem:[%s0 + $0x98] sm:$0xff]
  %v34 = vld [vmem:[%s0 + $0xa0] sm:$0xff]
  %v35 = vld [vmem:[%s0 + $0xa8] sm:$0xff]
  %v36 = vld [vmem:[%s0 + $0xb0] sm:$0xff]
  %v37 = vld [vmem:[%s0 + $0xb8] sm:$0xff]
  %v38 = vld [vmem:[%s0 + $0xc0] sm:$0xff]
  %v39 = vld [vmem:[%s0 + $0xc8] sm:$0xff]
  %v40 = vld [vmem:[%s0 + $0xd0] sm:$0xff]
  %v41 = vld [vmem:[%s0 + $0xd8] sm:$0xff]
  %v42 = vld [vmem:[%s0 + $0xe0] sm:$0xff]
  %v43 = vld [vmem:[%s0 + $0xe8] sm:$0xff]
  %v44 = vld [vmem:[%s0 + $0xf0] sm:$0xff]
  %v45 = vld [vmem:[%s0 + $0xf8] sm:$0xff]
  %v46 = vld [vmem:[%s0 + $0x100] sm:$0xff]
  %v47 = vld [vmem:[%s0 + $0x108] sm:$0xff]
  %v48 = vld [vmem:[%s0 + $0x110] sm:$0xff]
  %v49 = vld [vmem:[%s0 + $0x118] sm:$0xff]
  %v50 = vld [vmem:[%s0 + $0x120] sm:$0xff]
  %v51 = vld [vmem:[%s0 + $0x128] sm:$0xff]
  %v52 = vld [vmem:[%s0 + $0x130] sm:$0xff]
  %v53 = vld [vmem:[%s0 + $0x138] sm:$0xff]
  %v54 = vld [vmem:[%s0 + $0x140] sm:$0xff]
  %v55 = vld [vmem:[%s0 + $0x148] sm:$0xff]
  %v56 = vld [vmem:[%s0 + $0x150] sm:$0xff]
  %v57 = vld [vmem:[%s0 + $0x158] sm:$0xff]
  %v58 = vld [vmem:[%s0 + $0x160] sm:$0xff]
  %v59 = vld [vmem:[%s0 + $0x168] sm:$0xff]
  %v60 = vld [vmem:[%s0 + $0x170] sm:$0xff]
  %v61 = vld [vmem:[%s0 + $0x178] sm:$0xff]
  %v62 = vld [vmem:[%s0 + $0x180] sm:$0xff]
  %v63 = vld [vmem:[%s0 + $0x188] sm:$0xff]
  %v64 = vld [vmem:[%s0 + $0x190] sm:$0xff]
  %v65 = vld [vmem:[%s0 + $0x198] sm:$0xff]
  %v66 = vld [vmem:[%s0 + $0x1a0] sm:$0xff]
  %v67 = vld [vmem:[%s0 + $0x1a8] sm:$0xff]
  %v68 = vld [vmem:[%s0 + $0x1b0] sm:$0xff]
  %v69 = vld [vmem:[%s0 + $0x1b8] sm:$0xff]
  %v70 = vld [vmem:[%s0 + $0x1c0] sm:$0xff]
  %v71 = vld [vmem:[%s0 + $0x1c8] sm:$0xff]
  %v72 = vld [vmem:[%s0 + $0x1d0] sm:$0xff]
  %v73 = vld [vmem:[%s0 + $0x1d8] sm:$0xff]
  %v74 = vld [vmem:[%s0 + $0x1e0] sm:$0xff]
  %v75 = vld [vmem:[%s0 + $0x1e8] sm:$0xff]
  %v76 = vld [vmem:[%s0 + $0x1f0] sm:$0xff]
  %v77 = vld [vmem:[%s0 + $0x1f8] sm:$0xff]
  %v78 = vld [vmem:[%s1] sm:$0xff]
  %v79 = vld [vmem:[%s1 + $0x8] sm:$0xff]
  %v80 = vld [vmem:[%s2] sm:$0x1]
  %v82 = vlaneseq
  %v83 = vshrl.u32 %v82, 7
  %v84 = vsub.s32 0, %v83
  %v85 = vrot.slane %v80, %v84
  %vm87 = vcmask 130048
  %v89 = vsel %vm87, %v14, 0
  %v92 = vsel %vm87, %v15, 0
  %v95 = vsel %vm87, %v16, 0
  %v98 = vsel %vm87, %v17, 0
  %v101 = vsel %vm87, %v18, 0
  %v104 = vsel %vm87, %v19, 0
  %v107 = vsel %vm87, %v20, 0
  %v110 = vsel %vm87, %v21, 0
  %v113 = vsel %vm87, %v22, 0
  %v116 = vsel %vm87, %v23, 0
  %v119 = vsel %vm87, %v24, 0
  %v122 = vsel %vm87, %v25, 0
  %v125 = vsel %vm87, %v26, 0
  %v128 = vsel %vm87, %v27, 0
  %v131 = vsel %vm87, %v28, 0
  %v134 = vsel %vm87, %v29, 0
  %v137 = vsel %vm87, %v30, 0
  %v140 = vsel %vm87, %v31, 0
  %v143 = vsel %vm87, %v32, 0
  %v146 = vsel %vm87, %v33, 0
  %v149 = vsel %vm87, %v34, 0
  %v152 = vsel %vm87, %v35, 0
  %v155 = vsel %vm87, %v36, 0
  %v158 = vsel %vm87, %v37, 0
  %v161 = vsel %vm87, %v38, 0
  %v164 = vsel %vm87, %v39, 0
  %v167 = vsel %vm87, %v40, 0
  %v170 = vsel %vm87, %v41, 0
  %v173 = vsel %vm87, %v42, 0
  %v176 = vsel %vm87, %v43, 0
  %v179 = vsel %vm87, %v44, 0
  %v182 = vsel %vm87, %v45, 0
  %v185 = vsel %vm87, %v46, 0
  %v188 = vsel %vm87, %v47, 0
  %v191 = vsel %vm87, %v48, 0
  %v194 = vsel %vm87, %v49, 0
  %v197 = vsel %vm87, %v50, 0
  %v200 = vsel %vm87, %v51, 0
  %v203 = vsel %vm87, %v52, 0
  %v206 = vsel %vm87, %v53, 0
  %v209 = vsel %vm87, %v54, 0
  %v212 = vsel %vm87, %v55, 0
  %v215 = vsel %vm87, %v56, 0
  %v218 = vsel %vm87, %v57, 0
  %v221 = vsel %vm87, %v58, 0
  %v224 = vsel %vm87, %v59, 0
  %v227 = vsel %vm87, %v60, 0
  %v230 = vsel %vm87, %v61, 0
  %v233 = vsel %vm87, %v62, 0
  %v236 = vsel %vm87, %v63, 0
  %v239 = vsel %vm87, %v64, 0
  %v242 = vsel %vm87, %v65, 0
  %v245 = vsel %vm87, %v66, 0
  %v248 = vsel %vm87, %v67, 0
  %v251 = vsel %vm87, %v68, 0
  %v254 = vsel %vm87, %v69, 0
  %v257 = vsel %vm87, %v70, 0
  %v260 = vsel %vm87, %v71, 0
  %v263 = vsel %vm87, %v72, 0
  %v266 = vsel %vm87, %v73, 0
  %v269 = vsel %vm87, %v74, 0
  %v272 = vsel %vm87, %v75, 0
  %v275 = vsel %vm87, %v76, 0
  %v278 = vsel %vm87, %v77, 0
  %280 = vmatprep.subr.mxu0 0.0
  %281 = vmatpush1.msra.mxu0 0.0
  %282 = vmatprep.subr.mxu0 0.0
  %283 = vmatpush1.msra.mxu0 0.0
  %284 = vmatprep.subr.mxu0 0.0
  %285 = vmatpush1.msra.mxu0 0.0
  %286 = vmatprep.subr.mxu0 0.0
  %287 = vmatpush1.msra.mxu0 0.0
  %288 = vmatprep.subr.mxu0 0.0
  %289 = vmatpush1.msra.mxu0 0.0
  %290 = vmatprep.subr.mxu0 0.0
  %291 = vmatpush1.msra.mxu0 0.0
  %292 = vmatprep.subr.mxu0 0.0
  %293 = vmatpush1.msra.mxu0 0.0
  %294 = vmatprep.subr.mxu0 0.0
  %295 = vmatpush1.msra.mxu0 0.0
  %296 = vmatprep.subr.mxu0 0.0
  %297 = vmatpush1.msra.mxu0 0.0
  %298 = vmatprep.subr.mxu0 0.0
  %299 = vmatpush1.msra.mxu0 0.0
  %300 = vmatprep.subr.mxu0 0.0
  %301 = vmatpush1.msra.mxu0 0.0
  %302 = vmatprep.subr.mxu0 0.0
  %303 = vmatpush1.msra.mxu0 0.0
  %304 = vmatprep.subr.mxu0 0.0
  %305 = vmatpush1.msra.mxu0 0.0
  %306 = vmatprep.subr.mxu0 0.0
  %307 = vmatpush1.msra.mxu0 0.0
  %308 = vmatprep.subr.mxu0 0.0
  %309 = vmatpush1.msra.mxu0 %v79
  %310 = vmatprep.subr.mxu0 0.0
  %311 = vmatpush1.msra.mxu0 %v78
  %312 = vmatprep.subr.mxu0 0.0
  %313 = vmatpush2.msra.mxu0 0.0
  %314 = vmatprep.subr.mxu0 0.0
  %315 = vmatpush2.msra.mxu0 0.0
  %316 = vmatprep.subr.mxu0 0.0
  %317 = vmatpush2.msra.mxu0 0.0
  %318 = vmatprep.subr.mxu0 0.0
  %319 = vmatpush2.msra.mxu0 0.0
  %320 = vmatprep.subr.mxu0 0.0
  %321 = vmatpush2.msra.mxu0 0.0
  %322 = vmatprep.subr.mxu0 0.0
  %323 = vmatpush2.msra.mxu0 0.0
  %324 = vmatprep.subr.mxu0 0.0
  %325 = vmatpush2.msra.mxu0 0.0
  %326 = vmatprep.subr.mxu0 0.0
  %327 = vmatpush2.msra.mxu0 0.0
  %328 = vmatprep.subr.mxu0 0.0
  %329 = vmatpush2.msra.mxu0 0.0
  %330 = vmatprep.subr.mxu0 0.0
  %331 = vmatpush2.msra.mxu0 0.0
  %332 = vmatprep.subr.mxu0 0.0
  %333 = vmatpush2.msra.mxu0 0.0
  %334 = vmatprep.subr.mxu0 0.0
  %335 = vmatpush2.msra.mxu0 0.0
  %336 = vmatprep.subr.mxu0 0.0
  %337 = vmatpush2.msra.mxu0 0.0
  %338 = vmatprep.subr.mxu0 0.0
  %339 = vmatpush2.msra.mxu0 0.0
  %340 = vmatprep.subr.mxu0 0.0
  %341 = vmatpush2.msra.mxu0 0.0
  %342 = vmatprep.subr.mxu0 0.0
  %343 = vmatpush2.msra.mxu0 0.0
  %344 = vmatprep.mubr.f32.mxu0 0.0
  %345 = vmatmul.mubr.f32.gmra.mxu0 %v89
  %v346 = vpop.f32.mrf.mxu0
  %v347 = vadd.f32 %v85, %v346
  %v348 = vpop.f32.mrf.mxu0
  %349 = vmatprep.mubr.f32.mxu0 0.0
  %350 = vmatmul.mubr.f32.gmra.mxu0 %v92
  %v351 = vpop.f32.mrf.mxu0
  %v352 = vadd.f32 %v85, %v351
  %v353 = vpop.f32.mrf.mxu0
  %354 = vmatprep.mubr.f32.mxu0 0.0
  %355 = vmatmul.mubr.f32.gmra.mxu0 %v95
  %v356 = vpop.f32.mrf.mxu0
  %v357 = vadd.f32 %v85, %v356
  %v358 = vpop.f32.mrf.mxu0
  %359 = vmatprep.mubr.f32.mxu0 0.0
  %360 = vmatmul.mubr.f32.gmra.mxu0 %v98
  %v361 = vpop.f32.mrf.mxu0
  %v362 = vadd.f32 %v85, %v361
  %v363 = vpop.f32.mrf.mxu0
  %364 = vmatprep.mubr.f32.mxu0 0.0
  %365 = vmatmul.mubr.f32.gmra.mxu0 %v101
  %v366 = vpop.f32.mrf.mxu0
  %v367 = vadd.f32 %v85, %v366
  %v368 = vpop.f32.mrf.mxu0
  %369 = vmatprep.mubr.f32.mxu0 0.0
  %370 = vmatmul.mubr.f32.gmra.mxu0 %v104
  %v371 = vpop.f32.mrf.mxu0
  %v372 = vadd.f32 %v85, %v371
  %v373 = vpop.f32.mrf.mxu0
  %374 = vmatprep.mubr.f32.mxu0 0.0
  %375 = vmatmul.mubr.f32.gmra.mxu0 %v107
  %v376 = vpop.f32.mrf.mxu0
  %v377 = vadd.f32 %v85, %v376
  %v378 = vpop.f32.mrf.mxu0
  %379 = vmatprep.mubr.f32.mxu0 0.0
  %380 = vmatmul.mubr.f32.gmra.mxu0 %v110
  %v381 = vpop.f32.mrf.mxu0
  %v382 = vadd.f32 %v85, %v381
  %v383 = vpop.f32.mrf.mxu0
  %384 = vmatprep.mubr.f32.mxu0 0.0
  %385 = vmatmul.mubr.f32.gmra.mxu0 %v113
  %v386 = vpop.f32.mrf.mxu0
  %v387 = vadd.f32 %v85, %v386
  %v388 = vpop.f32.mrf.mxu0
  %389 = vmatprep.mubr.f32.mxu0 0.0
  %390 = vmatmul.mubr.f32.gmra.mxu0 %v116
  %v391 = vpop.f32.mrf.mxu0
  %v392 = vadd.f32 %v85, %v391
  %v393 = vpop.f32.mrf.mxu0
  %394 = vmatprep.mubr.f32.mxu0 0.0
  %395 = vmatmul.mubr.f32.gmra.mxu0 %v119
  %v396 = vpop.f32.mrf.mxu0
  %v397 = vadd.f32 %v85, %v396
  %v398 = vpop.f32.mrf.mxu0
  %399 = vmatprep.mubr.f32.mxu0 0.0
  %400 = vmatmul.mubr.f32.gmra.mxu0 %v122
  %v401 = vpop.f32.mrf.mxu0
  %v402 = vadd.f32 %v85, %v401
  %v403 = vpop.f32.mrf.mxu0
  %404 = vmatprep.mubr.f32.mxu0 0.0
  %405 = vmatmul.mubr.f32.gmra.mxu0 %v125
  %v406 = vpop.f32.mrf.mxu0
  %v407 = vadd.f32 %v85, %v406
  %v408 = vpop.f32.mrf.mxu0
  %409 = vmatprep.mubr.f32.mxu0 0.0
  %410 = vmatmul.mubr.f32.gmra.mxu0 %v128
  %v411 = vpop.f32.mrf.mxu0
  %v412 = vadd.f32 %v85, %v411
  %v413 = vpop.f32.mrf.mxu0
  %414 = vmatprep.mubr.f32.mxu0 0.0
  %415 = vmatmul.mubr.f32.gmra.mxu0 %v131
  %v416 = vpop.f32.mrf.mxu0
  %v417 = vadd.f32 %v85, %v416
  %v418 = vpop.f32.mrf.mxu0
  %419 = vmatprep.mubr.f32.mxu0 0.0
  %420 = vmatmul.mubr.f32.gmra.mxu0 %v134
  %v421 = vpop.f32.mrf.mxu0
  %v422 = vadd.f32 %v85, %v421
  %v423 = vpop.f32.mrf.mxu0
  %424 = vmatprep.mubr.f32.mxu0 0.0
  %425 = vmatmul.mubr.f32.gmra.mxu0 %v137
  %v426 = vpop.f32.mrf.mxu0
  %v427 = vadd.f32 %v85, %v426
  %v428 = vpop.f32.mrf.mxu0
  %429 = vmatprep.mubr.f32.mxu0 0.0
  %430 = vmatmul.mubr.f32.gmra.mxu0 %v140
  %v431 = vpop.f32.mrf.mxu0
  %v432 = vadd.f32 %v85, %v431
  %v433 = vpop.f32.mrf.mxu0
  %434 = vmatprep.mubr.f32.mxu0 0.0
  %435 = vmatmul.mubr.f32.gmra.mxu0 %v143
  %v436 = vpop.f32.mrf.mxu0
  %v437 = vadd.f32 %v85, %v436
  %v438 = vpop.f32.mrf.mxu0
  %439 = vmatprep.mubr.f32.mxu0 0.0
  %440 = vmatmul.mubr.f32.gmra.mxu0 %v146
  %v441 = vpop.f32.mrf.mxu0
  %v442 = vadd.f32 %v85, %v441
  %v443 = vpop.f32.mrf.mxu0
  %444 = vmatprep.mubr.f32.mxu0 0.0
  %445 = vmatmul.mubr.f32.gmra.mxu0 %v149
  %v446 = vpop.f32.mrf.mxu0
  %v447 = vadd.f32 %v85, %v446
  %v448 = vpop.f32.mrf.mxu0
  %449 = vmatprep.mubr.f32.mxu0 0.0
  %450 = vmatmul.mubr.f32.gmra.mxu0 %v152
  %v451 = vpop.f32.mrf.mxu0
  %v452 = vadd.f32 %v85, %v451
  %v453 = vpop.f32.mrf.mxu0
  %454 = vmatprep.mubr.f32.mxu0 0.0
  %455 = vmatmul.mubr.f32.gmra.mxu0 %v155
  %v456 = vpop.f32.mrf.mxu0
  %v457 = vadd.f32 %v85, %v456
  %v458 = vpop.f32.mrf.mxu0
  %459 = vmatprep.mubr.f32.mxu0 0.0
  %460 = vmatmul.mubr.f32.gmra.mxu0 %v158
  %v461 = vpop.f32.mrf.mxu0
  %v462 = vadd.f32 %v85, %v461
  %v463 = vpop.f32.mrf.mxu0
  %464 = vmatprep.mubr.f32.mxu0 0.0
  %465 = vmatmul.mubr.f32.gmra.mxu0 %v161
  %v466 = vpop.f32.mrf.mxu0
  %v467 = vadd.f32 %v85, %v466
  %v468 = vpop.f32.mrf.mxu0
  %469 = vmatprep.mubr.f32.mxu0 0.0
  %470 = vmatmul.mubr.f32.gmra.mxu0 %v164
  %v471 = vpop.f32.mrf.mxu0
  %v472 = vadd.f32 %v85, %v471
  %v473 = vpop.f32.mrf.mxu0
  %474 = vmatprep.mubr.f32.mxu0 0.0
  %475 = vmatmul.mubr.f32.gmra.mxu0 %v167
  %v476 = vpop.f32.mrf.mxu0
  %v477 = vadd.f32 %v85, %v476
  %v478 = vpop.f32.mrf.mxu0
  %479 = vmatprep.mubr.f32.mxu0 0.0
  %480 = vmatmul.mubr.f32.gmra.mxu0 %v170
  %v481 = vpop.f32.mrf.mxu0
  %v482 = vadd.f32 %v85, %v481
  %v483 = vpop.f32.mrf.mxu0
  %484 = vmatprep.mubr.f32.mxu0 0.0
  %485 = vmatmul.mubr.f32.gmra.mxu0 %v173
  %v486 = vpop.f32.mrf.mxu0
  %v487 = vadd.f32 %v85, %v486
  %v488 = vpop.f32.mrf.mxu0
  %489 = vmatprep.mubr.f32.mxu0 0.0
  %490 = vmatmul.mubr.f32.gmra.mxu0 %v176
  %v491 = vpop.f32.mrf.mxu0
  %v492 = vadd.f32 %v85, %v491
  %v493 = vpop.f32.mrf.mxu0
  %494 = vmatprep.mubr.f32.mxu0 0.0
  %495 = vmatmul.mubr.f32.gmra.mxu0 %v179
  %v496 = vpop.f32.mrf.mxu0
  %v497 = vadd.f32 %v85, %v496
  %v498 = vpop.f32.mrf.mxu0
  %499 = vmatprep.mubr.f32.mxu0 0.0
  %500 = vmatmul.mubr.f32.gmra.mxu0 %v182
  %v501 = vpop.f32.mrf.mxu0
  %v502 = vadd.f32 %v85, %v501
  %v503 = vpop.f32.mrf.mxu0
  %504 = vmatprep.mubr.f32.mxu0 0.0
  %505 = vmatmul.mubr.f32.gmra.mxu0 %v185
  %v506 = vpop.f32.mrf.mxu0
  %v507 = vadd.f32 %v85, %v506
  %v508 = vpop.f32.mrf.mxu0
  %509 = vmatprep.mubr.f32.mxu0 0.0
  %510 = vmatmul.mubr.f32.gmra.mxu0 %v188
  %v511 = vpop.f32.mrf.mxu0
  %v512 = vadd.f32 %v85, %v511
  %v513 = vpop.f32.mrf.mxu0
  %514 = vmatprep.mubr.f32.mxu0 0.0
  %515 = vmatmul.mubr.f32.gmra.mxu0 %v191
  %v516 = vpop.f32.mrf.mxu0
  %v517 = vadd.f32 %v85, %v516
  %v518 = vpop.f32.mrf.mxu0
  %519 = vmatprep.mubr.f32.mxu0 0.0
  %520 = vmatmul.mubr.f32.gmra.mxu0 %v194
  %v521 = vpop.f32.mrf.mxu0
  %v522 = vadd.f32 %v85, %v521
  %v523 = vpop.f32.mrf.mxu0
  %524 = vmatprep.mubr.f32.mxu0 0.0
  %525 = vmatmul.mubr.f32.gmra.mxu0 %v197
  %v526 = vpop.f32.mrf.mxu0
  %v527 = vadd.f32 %v85, %v526
  %v528 = vpop.f32.mrf.mxu0
  %529 = vmatprep.mubr.f32.mxu0 0.0
  %530 = vmatmul.mubr.f32.gmra.mxu0 %v200
  %v531 = vpop.f32.mrf.mxu0
  %v532 = vadd.f32 %v85, %v531
  %v533 = vpop.f32.mrf.mxu0
  %534 = vmatprep.mubr.f32.mxu0 0.0
  %535 = vmatmul.mubr.f32.gmra.mxu0 %v203
  %v536 = vpop.f32.mrf.mxu0
  %v537 = vadd.f32 %v85, %v536
  %v538 = vpop.f32.mrf.mxu0
  %539 = vmatprep.mubr.f32.mxu0 0.0
  %540 = vmatmul.mubr.f32.gmra.mxu0 %v206
  %v541 = vpop.f32.mrf.mxu0
  %v542 = vadd.f32 %v85, %v541
  %v543 = vpop.f32.mrf.mxu0
  %544 = vmatprep.mubr.f32.mxu0 0.0
  %545 = vmatmul.mubr.f32.gmra.mxu0 %v209
  %v546 = vpop.f32.mrf.mxu0
  %v547 = vadd.f32 %v85, %v546
  %v548 = vpop.f32.mrf.mxu0
  %549 = vmatprep.mubr.f32.mxu0 0.0
  %550 = vmatmul.mubr.f32.gmra.mxu0 %v212
  %v551 = vpop.f32.mrf.mxu0
  %v552 = vadd.f32 %v85, %v551
  %v553 = vpop.f32.mrf.mxu0
  %554 = vmatprep.mubr.f32.mxu0 0.0
  %555 = vmatmul.mubr.f32.gmra.mxu0 %v215
  %v556 = vpop.f32.mrf.mxu0
  %v557 = vadd.f32 %v85, %v556
  %v558 = vpop.f32.mrf.mxu0
  %559 = vmatprep.mubr.f32.mxu0 0.0
  %560 = vmatmul.mubr.f32.gmra.mxu0 %v218
  %v561 = vpop.f32.mrf.mxu0
  %v562 = vadd.f32 %v85, %v561
  %v563 = vpop.f32.mrf.mxu0
  %564 = vmatprep.mubr.f32.mxu0 0.0
  %565 = vmatmul.mubr.f32.gmra.mxu0 %v221
  %v566 = vpop.f32.mrf.mxu0
  %v567 = vadd.f32 %v85, %v566
  %v568 = vpop.f32.mrf.mxu0
  %569 = vmatprep.mubr.f32.mxu0 0.0
  %570 = vmatmul.mubr.f32.gmra.mxu0 %v224
  %v571 = vpop.f32.mrf.mxu0
  %v572 = vadd.f32 %v85, %v571
  %v573 = vpop.f32.mrf.mxu0
  %574 = vmatprep.mubr.f32.mxu0 0.0
  %575 = vmatmul.mubr.f32.gmra.mxu0 %v227
  %v576 = vpop.f32.mrf.mxu0
  %v577 = vadd.f32 %v85, %v576
  %v578 = vpop.f32.mrf.mxu0
  %579 = vmatprep.mubr.f32.mxu0 0.0
  %580 = vmatmul.mubr.f32.gmra.mxu0 %v230
  %v581 = vpop.f32.mrf.mxu0
  %v582 = vadd.f32 %v85, %v581
  %v583 = vpop.f32.mrf.mxu0
  %584 = vmatprep.mubr.f32.mxu0 0.0
  %585 = vmatmul.mubr.f32.gmra.mxu0 %v233
  %v586 = vpop.f32.mrf.mxu0
  %v587 = vadd.f32 %v85, %v586
  %v588 = vpop.f32.mrf.mxu0
  %589 = vmatprep.mubr.f32.mxu0 0.0
  %590 = vmatmul.mubr.f32.gmra.mxu0 %v236
  %v591 = vpop.f32.mrf.mxu0
  %v592 = vadd.f32 %v85, %v591
  %v593 = vpop.f32.mrf.mxu0
  %594 = vmatprep.mubr.f32.mxu0 0.0
  %595 = vmatmul.mubr.f32.gmra.mxu0 %v239
  %v596 = vpop.f32.mrf.mxu0
  %v597 = vadd.f32 %v85, %v596
  %v598 = vpop.f32.mrf.mxu0
  %599 = vmatprep.mubr.f32.mxu0 0.0
  %600 = vmatmul.mubr.f32.gmra.mxu0 %v242
  %v601 = vpop.f32.mrf.mxu0
  %v602 = vadd.f32 %v85, %v601
  %v603 = vpop.f32.mrf.mxu0
  %604 = vmatprep.mubr.f32.mxu0 0.0
  %605 = vmatmul.mubr.f32.gmra.mxu0 %v245
  %v606 = vpop.f32.mrf.mxu0
  %v607 = vadd.f32 %v85, %v606
  %v608 = vpop.f32.mrf.mxu0
  %609 = vmatprep.mubr.f32.mxu0 0.0
  %610 = vmatmul.mubr.f32.gmra.mxu0 %v248
  %v611 = vpop.f32.mrf.mxu0
  %v612 = vadd.f32 %v85, %v611
  %v613 = vpop.f32.mrf.mxu0
  %614 = vmatprep.mubr.f32.mxu0 0.0
  %615 = vmatmul.mubr.f32.gmra.mxu0 %v251
  %v616 = vpop.f32.mrf.mxu0
  %v617 = vadd.f32 %v85, %v616
  %v618 = vpop.f32.mrf.mxu0
  %619 = vmatprep.mubr.f32.mxu0 0.0
  %620 = vmatmul.mubr.f32.gmra.mxu0 %v254
  %v621 = vpop.f32.mrf.mxu0
  %v622 = vadd.f32 %v85, %v621
  %v623 = vpop.f32.mrf.mxu0
  %624 = vmatprep.mubr.f32.mxu0 0.0
  %625 = vmatmul.mubr.f32.gmra.mxu0 %v257
  %v626 = vpop.f32.mrf.mxu0
  %v627 = vadd.f32 %v85, %v626
  %v628 = vpop.f32.mrf.mxu0
  %629 = vmatprep.mubr.f32.mxu0 0.0
  %630 = vmatmul.mubr.f32.gmra.mxu0 %v260
  %v631 = vpop.f32.mrf.mxu0
  %v632 = vadd.f32 %v85, %v631
  %v633 = vpop.f32.mrf.mxu0
  %634 = vmatprep.mubr.f32.mxu0 0.0
  %635 = vmatmul.mubr.f32.gmra.mxu0 %v263
  %v636 = vpop.f32.mrf.mxu0
  %v637 = vadd.f32 %v85, %v636
  %v638 = vpop.f32.mrf.mxu0
  %639 = vmatprep.mubr.f32.mxu0 0.0
  %640 = vmatmul.mubr.f32.gmra.mxu0 %v266
  %v641 = vpop.f32.mrf.mxu0
  %v642 = vadd.f32 %v85, %v641
  %v643 = vpop.f32.mrf.mxu0
  %644 = vmatprep.mubr.f32.mxu0 0.0
  %645 = vmatmul.mubr.f32.gmra.mxu0 %v269
  %v646 = vpop.f32.mrf.mxu0
  %v647 = vadd.f32 %v85, %v646
  %v648 = vpop.f32.mrf.mxu0
  %649 = vmatprep.mubr.f32.mxu0 0.0
  %650 = vmatmul.mubr.f32.gmra.mxu0 %v272
  %v651 = vpop.f32.mrf.mxu0
  %v652 = vadd.f32 %v85, %v651
  %v653 = vpop.f32.mrf.mxu0
  %654 = vmatprep.mubr.f32.mxu0 0.0
  %655 = vmatmul.mubr.f32.gmra.mxu0 %v275
  %v656 = vpop.f32.mrf.mxu0
  %v657 = vadd.f32 %v85, %v656
  %v658 = vpop.f32.mrf.mxu0
  %659 = vmatprep.mubr.f32.mxu0 0.0
  %660 = vmatmul.mubr.f32.gmra.mxu0 %v278
  %v661 = vpop.f32.mrf.mxu0
  %v662 = vadd.f32 %v85, %v661
  %v663 = vpop.f32.mrf.mxu0
  %664 = vdwg.mxu0
  %665 = vst.msk [vmem:[%s3] sm:$0xff] %vm87, %v347
  %666 = vst.msk [vmem:[%s3 + $0x8] sm:$0xff] %vm87, %v352
  %667 = vst.msk [vmem:[%s3 + $0x10] sm:$0xff] %vm87, %v357
  %668 = vst.msk [vmem:[%s3 + $0x18] sm:$0xff] %vm87, %v362
  %669 = vst.msk [vmem:[%s3 + $0x20] sm:$0xff] %vm87, %v367
  %670 = vst.msk [vmem:[%s3 + $0x28] sm:$0xff] %vm87, %v372
  %671 = vst.msk [vmem:[%s3 + $0x30] sm:$0xff] %vm87, %v377
  %672 = vst.msk [vmem:[%s3 + $0x38] sm:$0xff] %vm87, %v382
  %673 = vst.msk [vmem:[%s3 + $0x40] sm:$0xff] %vm87, %v387
  %674 = vst.msk [vmem:[%s3 + $0x48] sm:$0xff] %vm87, %v392
  %675 = vst.msk [vmem:[%s3 + $0x50] sm:$0xff] %vm87, %v397
  %676 = vst.msk [vmem:[%s3 + $0x58] sm:$0xff] %vm87, %v402
  %677 = vst.msk [vmem:[%s3 + $0x60] sm:$0xff] %vm87, %v407
  %678 = vst.msk [vmem:[%s3 + $0x68] sm:$0xff] %vm87, %v412
  %679 = vst.msk [vmem:[%s3 + $0x70] sm:$0xff] %vm87, %v417
  %680 = vst.msk [vmem:[%s3 + $0x78] sm:$0xff] %vm87, %v422
  %681 = vst.msk [vmem:[%s3 + $0x80] sm:$0xff] %vm87, %v427
  %682 = vst.msk [vmem:[%s3 + $0x88] sm:$0xff] %vm87, %v432
  %683 = vst.msk [vmem:[%s3 + $0x90] sm:$0xff] %vm87, %v437
  %684 = vst.msk [vmem:[%s3 + $0x98] sm:$0xff] %vm87, %v442
  %685 = vst.msk [vmem:[%s3 + $0xa0] sm:$0xff] %vm87, %v447
  %686 = vst.msk [vmem:[%s3 + $0xa8] sm:$0xff] %vm87, %v452
  %687 = vst.msk [vmem:[%s3 + $0xb0] sm:$0xff] %vm87, %v457
  %688 = vst.msk [vmem:[%s3 + $0xb8] sm:$0xff] %vm87, %v462
  %689 = vst.msk [vmem:[%s3 + $0xc0] sm:$0xff] %vm87, %v467
  %690 = vst.msk [vmem:[%s3 + $0xc8] sm:$0xff] %vm87, %v472
  %691 = vst.msk [vmem:[%s3 + $0xd0] sm:$0xff] %vm87, %v477
  %692 = vst.msk [vmem:[%s3 + $0xd8] sm:$0xff] %vm87, %v482
  %693 = vst.msk [vmem:[%s3 + $0xe0] sm:$0xff] %vm87, %v487
  %694 = vst.msk [vmem:[%s3 + $0xe8] sm:$0xff] %vm87, %v492
  %695 = vst.msk [vmem:[%s3 + $0xf0] sm:$0xff] %vm87, %v497
  %696 = vst.msk [vmem:[%s3 + $0xf8] sm:$0xff] %vm87, %v502
  %697 = vst.msk [vmem:[%s3 + $0x100] sm:$0xff] %vm87, %v507
  %698 = vst.msk [vmem:[%s3 + $0x108] sm:$0xff] %vm87, %v512
  %699 = vst.msk [vmem:[%s3 + $0x110] sm:$0xff] %vm87, %v517
  %700 = vst.msk [vmem:[%s3 + $0x118] sm:$0xff] %vm87, %v522
  %701 = vst.msk [vmem:[%s3 + $0x120] sm:$0xff] %vm87, %v527
  %702 = vst.msk [vmem:[%s3 + $0x128] sm:$0xff] %vm87, %v532
  %703 = vst.msk [vmem:[%s3 + $0x130] sm:$0xff] %vm87, %v537
  %704 = vst.msk [vmem:[%s3 + $0x138] sm:$0xff] %vm87, %v542
  %705 = vst.msk [vmem:[%s3 + $0x140] sm:$0xff] %vm87, %v547
  %706 = vst.msk [vmem:[%s3 + $0x148] sm:$0xff] %vm87, %v552
  %707 = vst.msk [vmem:[%s3 + $0x150] sm:$0xff] %vm87, %v557
  %708 = vst.msk [vmem:[%s3 + $0x158] sm:$0xff] %vm87, %v562
  %709 = vst.msk [vmem:[%s3 + $0x160] sm:$0xff] %vm87, %v567
  %710 = vst.msk [vmem:[%s3 + $0x168] sm:$0xff] %vm87, %v572
  %711 = vst.msk [vmem:[%s3 + $0x170] sm:$0xff] %vm87, %v577
  %712 = vst.msk [vmem:[%s3 + $0x178] sm:$0xff] %vm87, %v582
  %713 = vst.msk [vmem:[%s3 + $0x180] sm:$0xff] %vm87, %v587
  %714 = vst.msk [vmem:[%s3 + $0x188] sm:$0xff] %vm87, %v592
  %715 = vst.msk [vmem:[%s3 + $0x190] sm:$0xff] %vm87, %v597
  %716 = vst.msk [vmem:[%s3 + $0x198] sm:$0xff] %vm87, %v602
  %717 = vst.msk [vmem:[%s3 + $0x1a0] sm:$0xff] %vm87, %v607
  %718 = vst.msk [vmem:[%s3 + $0x1a8] sm:$0xff] %vm87, %v612
  %719 = vst.msk [vmem:[%s3 + $0x1b0] sm:$0xff] %vm87, %v617
  %720 = vst.msk [vmem:[%s3 + $0x1b8] sm:$0xff] %vm87, %v622
  %721 = vst.msk [vmem:[%s3 + $0x1c0] sm:$0xff] %vm87, %v627
  %722 = vst.msk [vmem:[%s3 + $0x1c8] sm:$0xff] %vm87, %v632
  %723 = vst.msk [vmem:[%s3 + $0x1d0] sm:$0xff] %vm87, %v637
  %724 = vst.msk [vmem:[%s3 + $0x1d8] sm:$0xff] %vm87, %v642
  %725 = vst.msk [vmem:[%s3 + $0x1e0] sm:$0xff] %vm87, %v647
  %726 = vst.msk [vmem:[%s3 + $0x1e8] sm:$0xff] %vm87, %v652
  %727 = vst.msk [vmem:[%s3 + $0x1f0] sm:$0xff] %vm87, %v657
  %728 = vst.msk [vmem:[%s3 + $0x1f8] sm:$0xff] %vm87, %v662
  // Predicated region
  $region14: #{tpu_custom_call.1} parent=0 // pred_check
    _
  $region15: #{tpu_custom_call.1} parent=0 // pred_check_branch
    %730 = sbr.rel (0) target = $region17
  $region16: #{tpu_custom_call.1} parent=0 // pred_region
    _
  $region17: #{tpu_custom_call.1} parent=0 // pred_fallthru
    _
  // Predicated region
  $region18: #{tpu_custom_call.1} parent=0 // pred_check
    _
  $region19: #{tpu_custom_call.1} parent=0 // pred_check_branch
    %732 = sbr.rel (0) target = $region21
  $region20: #{tpu_custom_call.1} parent=0 // pred_region
    _
  $region21: #{tpu_custom_call.1} parent=0 // pred_fallthru
    _

</llo_original>
